<compile_context>
chip_gen: v5e
topology: v5e:2x2
jax: 0.10.0
libtpu: 0.0.40
codegen_flags: <defaults>
</compile_context>

<pallas_src>
import functools
import math

import jax
import jax.numpy as jnp
from jax.experimental import pallas as pl
from jax.experimental.pallas import tpu as pltpu


# ----------------------------------------------------------------------------- helpers
def _rup(x, m):
    return (x + m - 1) // m * m


def _num_tensorcores():
    """Best-effort TensorCore count (2 on v7x, else 1). Safe fallback = 1 (no split)."""
    try:
        dev = jax.devices()[0]
        n = getattr(dev, "num_cores", None)
        if n is not None:
            return max(1, int(n))
        kind = str(getattr(dev, "device_kind", "")).lower()
        if "v7" in kind or "7x" in kind:
            return 2
    except Exception:
        pass
    return 1


_NUM_CORES = _num_tensorcores()

_A_BLOCK_BUDGET = 3 << 20   # bytes for one bf16 A block (double-buffered by Pallas)
_B_BLOCK_BUDGET = 3 << 20   # bytes for one bf16 B block


def _pick_m_tile(m, k):
    """Row tile: prefer a single full-M block, then exact divisors; pad only as a last resort."""
    max_tm = max(16, min(1024, (_A_BLOCK_BUDGET // (2 * k)) // 8 * 8))
    if m <= max_tm:
        return m, m                                     # one full-dim block, no padding
    for c in (512, 448, 384, 320, 256, 192, 128, 112, 64, 56, 32, 16, 8):
        if c <= max_tm and m % c == 0:
            return c, m                                 # exact divisor, no padding copies
    tm = min(256, max_tm)
    return tm, _rup(m, tm)                              # last resort: pad rows


def _pick_n_tile(n, k):
    """Column tile: lane-dense 512/384/256/128 when it divides N, else a full small-N block."""
    max_tn = max(128, min(1024, (_B_BLOCK_BUDGET // (2 * k)) // 128 * 128))
    for c in (512, 384, 256, 128):
        if c <= max_tn and n % c == 0:
            return c, n
    if n <= 512:
        return n, n                                     # small / odd N: one full block
    return 128, _rup(n, 128)


def _pick_pool_rows(mr):
    if mr <= 2048:
        return mr, mr
    for c in (2048, 1024, 512, 448, 384, 256, 224, 128, 64, 32, 16, 8):
        if mr % c == 0:
            return c, mr
    return 512, _rup(mr, 512)


def _vmem_limit(*block_bytes):
    """Right-sized VMEM budget: double-buffered blocks + slack, capped under v7x physical."""
    need = 2 * sum(int(b) for b in block_bytes) + (2 << 20)
    return int(min(max(need, 8 << 20), 48 << 20))


# ----------------------------------------------------------------------------- Pallas kernels
def _mm_kernel(a_ref, b_ref, t_ref, o_ref, *, apply_relu):
    """o = relu?( (A @ B) + bias ).  A/B bf16 (BN scale pre-folded into B), f32 accumulate."""
    acc = jnp.dot(a_ref[...], b_ref[...], preferred_element_type=jnp.float32)
    y = acc + t_ref[...]
    if apply_relu:
        y = jnp.maximum(y, 0.0)
    o_ref[...] = y.astype(o_ref.dtype)


def _mm_res_kernel(a_ref, b_ref, t_ref, r_ref, o_ref, *, apply_relu):
    """o = relu?( (A @ B) + bias + residual )  -- fused bottleneck tail (residual in bf16)."""
    acc = jnp.dot(a_ref[...], b_ref[...], preferred_element_type=jnp.float32)
    y = acc + t_ref[...] + r_ref[...].astype(jnp.float32)
    if apply_relu:
        y = jnp.maximum(y, 0.0)
    o_ref[...] = y.astype(o_ref.dtype)


@functools.partial(jax.jit, static_argnames=("apply_relu", "out_dtype"))
def matmul_affine(a, b, bias, residual=None, *, apply_relu, out_dtype=jnp.bfloat16):
    """a:[M,K]  b:[K,N] bf16 (scale folded)  bias:[N]  (residual:[M,N] optional) -> [M,N]."""
    M, K = a.shape
    K2, N = b.shape
    assert K == K2, (K, K2)
    tm, Mp = _pick_m_tile(M, K)
    tn, Np = _pick_n_tile(N, K)
    # Megacore: only when >=2 TensorCores (v7x) and the grid would be 1x1, split the M axis
    # (keeps stores 128-lane dense and the MXU at full width).  v5e/v6e: no split.
    if Mp // tm == 1 and Np // tn == 1 and _NUM_CORES >= 2 and tm % 16 == 0 and tm >= 32:
        tm //= 2

    a_p = a.astype(jnp.bfloat16)                         # no-op when activations are bf16
    if Mp != M:
        a_p = jnp.pad(a_p, ((0, Mp - M), (0, 0)))
    b_p = b.astype(jnp.bfloat16)
    t_p = bias.reshape(1, -1).astype(jnp.float32)
    if Np != N:
        b_p = jnp.pad(b_p, ((0, 0), (0, Np - N)))
        t_p = jnp.pad(t_p, ((0, 0), (0, Np - N)))

    in_specs = [
        pl.BlockSpec((tm, K), lambda i, j: (i, 0)),      # full-K block: no K grid axis
        pl.BlockSpec((K, tn), lambda i, j: (0, j)),
        pl.BlockSpec((1, tn), lambda i, j: (0, j)),
    ]
    args = [a_p, b_p, t_p]
    blk_bytes = [tm * K * 2, K * tn * 2, tn * 4, tm * tn * 4]
    if residual is not None:
        r_p = residual.astype(jnp.bfloat16)
        if Mp != M or Np != N:
            r_p = jnp.pad(r_p, ((0, Mp - M), (0, Np - N)))
        in_specs.append(pl.BlockSpec((tm, tn), lambda i, j: (i, j)))
        args.append(r_p)
        blk_bytes.append(tm * tn * 2)
        kernel = functools.partial(_mm_res_kernel, apply_relu=apply_relu)
    else:
        kernel = functools.partial(_mm_kernel, apply_relu=apply_relu)

    out = pl.pallas_call(
        kernel,
        out_shape=jax.ShapeDtypeStruct((Mp, Np), out_dtype),
        grid=(Mp // tm, Np // tn),
        in_specs=in_specs,
        out_specs=pl.BlockSpec((tm, tn), lambda i, j: (i, j)),
        compiler_params=pltpu.CompilerParams(
            dimension_semantics=("parallel", "parallel"),
            vmem_limit_bytes=_vmem_limit(*blk_bytes)),
    )(*args)
    if Mp != M or Np != N:
        out = out[:M, :N]
    return out


def _maxpool_kernel(p_ref, o_ref):
    m = p_ref[0]
    for i in range(1, p_ref.shape[0]):
        m = jnp.maximum(m, p_ref[i])
    o_ref[...] = m


@jax.jit
def _maxpool_reduce(pat):
    """pat: [KK, Mr, L] (bf16, lane-dense L) -> elementwise max over KK -> [Mr, L]."""
    KK, Mr, L = pat.shape
    bm, Mp = _pick_pool_rows(Mr)
    if Mp != Mr:
        pat = jnp.pad(pat, ((0, 0), (0, Mp - Mr), (0, 0)))   # zeros are fine: input >= 0
    out = pl.pallas_call(
        _maxpool_kernel,
        out_shape=jax.ShapeDtypeStruct((Mp, L), pat.dtype),
        grid=(Mp // bm,),
        in_specs=[pl.BlockSpec((KK, bm, L), lambda i: (0, i, 0))],
        out_specs=pl.BlockSpec((bm, L), lambda i: (i, 0)),
        compiler_params=pltpu.CompilerParams(
            dimension_semantics=("parallel",),
            vmem_limit_bytes=_vmem_limit(KK * bm * L * 2, bm * L * 2)),
    )(pat)
    return out[:Mr] if Mp != Mr else out


# ----------------------------------------------------------------------------- conv / pool glue
@functools.partial(jax.jit, static_argnames=("kh", "kw", "stride", "padding", "relu"))
def conv_bn_act(x, w_mat, bias, residual=None, *, kh, kw, stride, padding, relu):
    """x: NHWC bf16.  w_mat: [Kp, O] bf16 (BN scale folded, K possibly lane-padded).
    Conv (bias-free) + inference BN + optional ReLU (+ optional residual add), fused into
    the Pallas matmul epilogue; output is bf16."""
    N, H, W, C = x.shape
    Kp, O = w_mat.shape
    OH = (H + 2 * padding - kh) // stride + 1
    OW = (W + 2 * padding - kw) // stride + 1

    if kh == 1 and kw == 1:
        a = (x if stride == 1 else x[:, ::stride, ::stride, :]).reshape(N * OH * OW, C)
    else:
        xp = x
        if padding:
            xp = jnp.pad(xp, ((0, 0), (padding, padding), (padding, padding), (0, 0)))
        cols = [xp[:, i:i + stride * OH:stride, j:j + stride * OW:stride, :]
                for i in range(kh) for j in range(kw)]
        if Kp > kh * kw * C:   # stem: K padded to a lane-aligned size at prep time
            cols.append(jnp.zeros((N, OH, OW, Kp - kh * kw * C), x.dtype))
        # TODO(synk): replace this bf16 im2col HBM materialization with an in-kernel
        #             shifted-window tap accumulation (kh*kw 'arbitrary' grid axis).
        a = jnp.concatenate(cols, axis=-1).reshape(N * OH * OW, Kp)

    r = None if residual is None else residual.reshape(N * OH * OW, O)
    y = matmul_affine(a, w_mat, bias, r, apply_relu=relu, out_dtype=jnp.bfloat16)
    return y.reshape(N, OH, OW, O)


def maxpool_3x3_s2(x):
    """torch.nn.MaxPool2d(kernel_size=3, stride=2, padding=1) on NHWC bf16 (post-ReLU)."""
    N, H, W, C = x.shape
    k, s, p = 3, 2, 1
    OH = (H + 2 * p - k) // s + 1
    OW = (W + 2 * p - k) // s + 1
    # Input is post-ReLU (>= 0), so zero padding is equivalent to -inf for max.
    xp = jnp.pad(x, ((0, 0), (p, p), (p, p), (0, 0)))
    slices = [xp[:, i:i + s * OH:s, j:j + s * OW:s, :] for i in range(k) for j in range(k)]
    pat = jnp.stack(slices, axis=0)                     # [9, N, OH, OW, C] bf16
    M = N * OH * OW
    if (M * C) % 128 == 0:
        pat = pat.reshape(k * k, (M * C) // 128, 128)   # lane-dense view (free, row-major)
    else:
        pat = pat.reshape(k * k, M, C)
    out = _maxpool_reduce(pat)
    return out.reshape(N, OH, OW, C)


# ----------------------------------------------------------------------------- ResNet50 structure
LAYER_CFG = [(64, 3, 1), (128, 4, 2), (256, 6, 2), (512, 3, 2)]  # (planes, blocks, stride)


def _make_bn(key, c):
    k1, k2, k3, k4 = jax.random.split(key, 4)
    return {
        "gamma": 1.0 + 0.1 * jax.random.normal(k1, (c,), jnp.float32),
        "beta": 0.1 * jax.random.normal(k2, (c,), jnp.float32),
        "mean": 0.1 * jax.random.normal(k3, (c,), jnp.float32),
        "var": jax.random.uniform(k4, (c,), jnp.float32, 0.5, 1.5),
    }


def _make_conv(key, cout, cin, kh, kw):
    fan_in = cin * kh * kw
    return jax.random.normal(key, (cout, cin, kh, kw), jnp.float32) * math.sqrt(2.0 / fan_in)


def init_params(key):
    keys = iter(jax.random.split(key, 512))
    nk = lambda: next(keys)
    params = {"conv1": _make_conv(nk(), 64, 3, 7, 7), "bn1": _make_bn(nk(), 64)}
    inplanes = 64
    layers = []
    for planes, nblocks, stride in LAYER_CFG:
        blocks = []
        for b in range(nblocks):
            s = stride if b == 0 else 1
            blk = {
                "conv1": _make_conv(nk(), planes, inplanes, 1, 1), "bn1": _make_bn(nk(), planes),
                "conv2": _make_conv(nk(), planes, planes, 3, 3), "bn2": _make_bn(nk(), planes),
                "conv3": _make_conv(nk(), planes * 4, planes, 1, 1), "bn3": _make_bn(nk(), planes * 4),
            }
            if b == 0 and (s != 1 or inplanes != planes * 4):
                blk["down_conv"] = _make_conv(nk(), planes * 4, inplanes, 1, 1)
                blk["down_bn"] = _make_bn(nk(), planes * 4)
            blocks.append(blk)
            inplanes = planes * 4
        layers.append(blocks)
    params["layers"] = layers
    params["fc_w"] = jax.random.normal(nk(), (13, 2048), jnp.float32) * (1.0 / math.sqrt(2048))
    params["fc_b"] = 0.01 * jax.random.normal(nk(), (13,), jnp.float32)
    return params


def _prep_conv(w, bn, k_pad_to=None):
    """One-time prep: OIHW -> [kh*kw*Ci, O], BN scale folded into the weights (f32), then bf16."""
    O, Ci, kh, kw = w.shape
    scale = bn["gamma"] * jax.lax.rsqrt(bn["var"] + 1e-5)
    bias = bn["beta"] - bn["mean"] * scale
    w_mat = jnp.transpose(w, (2, 3, 1, 0)).reshape(kh * kw * Ci, O) * scale[None, :]
    if k_pad_to is not None and k_pad_to > w_mat.shape[0]:
        w_mat = jnp.pad(w_mat, ((0, k_pad_to - w_mat.shape[0]), (0, 0)))
    return {"w": w_mat.astype(jnp.bfloat16), "bias": bias.astype(jnp.float32)}


def prepare_params(params):
    pp = {"stem": _prep_conv(params["conv1"], params["bn1"], k_pad_to=256), "layers": []}
    for layer in params["layers"]:
        blocks = []
        for blk in layer:
            pb = {
                "conv1": _prep_conv(blk["conv1"], blk["bn1"]),
                "conv2": _prep_conv(blk["conv2"], blk["bn2"]),
                "conv3": _prep_conv(blk["conv3"], blk["bn3"]),
            }
            if "down_conv" in blk:
                pb["down"] = _prep_conv(blk["down_conv"], blk["down_bn"])
            blocks.append(pb)
        pp["layers"].append(blocks)
    # FC head: [2048, 13] -> pad N to 128 for an unmasked lane-dense final store.
    fc_w = jnp.pad(params["fc_w"].T, ((0, 0), (0, 128 - 13)))
    fc_b = jnp.pad(params["fc_b"], (0, 128 - 13))
    pp["fc_w"] = fc_w.astype(jnp.bfloat16)
    pp["fc_b"] = fc_b.astype(jnp.float32)
    return pp


def bottleneck(x, blk, stride):
    out = conv_bn_act(x, blk["conv1"]["w"], blk["conv1"]["bias"],
                      kh=1, kw=1, stride=1, padding=0, relu=True)
    out = conv_bn_act(out, blk["conv2"]["w"], blk["conv2"]["bias"],
                      kh=3, kw=3, stride=stride, padding=1, relu=True)
    if "down" in blk:
        identity = conv_bn_act(x, blk["down"]["w"], blk["down"]["bias"],
                               kh=1, kw=1, stride=stride, padding=0, relu=False)
    else:
        identity = x
    # conv3: BN + residual add + ReLU fused into the matmul epilogue.
    return conv_bn_act(out, blk["conv3"]["w"], blk["conv3"]["bias"], identity,
                       kh=1, kw=1, stride=1, padding=0, relu=True)


@jax.jit
def transfer_learning_forward(x_nchw, pparams):
    """Equivalent of TransferLearning.forward: ResNet50 backbone + Linear(2048, 13)."""
    x = jnp.transpose(x_nchw, (0, 2, 3, 1)).astype(jnp.bfloat16)   # NCHW -> NHWC bf16
    s = pparams["stem"]
    x = conv_bn_act(x, s["w"], s["bias"], kh=7, kw=7, stride=2, padding=3, relu=True)
    x = maxpool_3x3_s2(x)
    for li, (planes, nblocks, stride) in enumerate(LAYER_CFG):
        for b in range(nblocks):
            x = bottleneck(x, pparams["layers"][li][b], stride if b == 0 else 1)
    # adaptive average pool to 1x1 (tiny spatial; plain-JAX glue, accumulated in f32)
    x = jnp.mean(x.astype(jnp.float32), axis=(1, 2))                # [N, 2048]
    logits = matmul_affine(x, pparams["fc_w"], pparams["fc_b"],
                           apply_relu=False, out_dtype=jnp.float32)
    return logits[:, :13]                                           # [N, 13]


# ----------------------------------------------------------------------------- demo
if __name__ == "__main__":
    key = jax.random.PRNGKey(0)
    pkey, xkey = jax.random.split(key)
    raw_params = init_params(pkey)
    params = prepare_params(raw_params)                             # one-time fold/reshape
    x = jax.random.normal(xkey, (2, 3, 32, 32), dtype=jnp.float32)  # NCHW, like PyTorch
    logits = transfer_learning_forward(x, params)
    logits = jax.block_until_ready(logits)
    assert logits.shape == (2, 13), logits.shape
    assert bool(jnp.all(jnp.isfinite(logits)))
    print("KERNEL_OK")
</pallas_src>

<mosaic_0001>
module attributes {stable_mosaic.version = 11 : i64} {
  func.func @_mm_kernel(%arg0: i32, %arg1: i32, %arg2: memref<512x256xbf16, #tpu.memory_space<vmem>>, %arg3: memref<256x64xbf16, #tpu.memory_space<vmem>>, %arg4: memref<1x64xf32, #tpu.memory_space<vmem>>, %arg5: memref<512x64xbf16, #tpu.memory_space<vmem>>) attributes {dimension_semantics = [#tpu.dimension_semantics<parallel>, #tpu.dimension_semantics<parallel>], iteration_bounds = array<i64: 1, 1>, scalar_prefetch = 0 : i64, scratch_operands = 0 : i64, tpu.core_type = #tpu.core_type<tc>, window_params = [{transform_indices = @transform_0, window_bounds = array<i64: 512, 256>}, {transform_indices = @transform_1, window_bounds = array<i64: 256, 64>}, {transform_indices = @transform_2, window_bounds = array<i64: 1, 64>}, {transform_indices = @transform_3, window_bounds = array<i64: 512, 64>}]} {
    %c0 = arith.constant 0 : index
    %c0_0 = arith.constant 0 : index
    %0 = vector.load %arg2[%c0, %c0_0] : memref<512x256xbf16, #tpu.memory_space<vmem>>, vector<512x256xbf16>
    %c0_1 = arith.constant 0 : index
    %c0_2 = arith.constant 0 : index
    %1 = vector.load %arg3[%c0_1, %c0_2] : memref<256x64xbf16, #tpu.memory_space<vmem>>, vector<256x64xbf16>
    %cst = arith.constant dense<0.000000e+00> : vector<512x64xf32>
    %2 = tpu.matmul %0, %1, %cst {dimension_numbers = #tpu.dot_dimension_numbers<[1], [0], [0], [1], [0, 0, 1, 1], [], []>} : vector<512x256xbf16>, vector<256x64xbf16>, vector<512x64xf32> -> vector<512x64xf32>
    %c0_3 = arith.constant 0 : index
    %c0_4 = arith.constant 0 : index
    %3 = vector.load %arg4[%c0_3, %c0_4] : memref<1x64xf32, #tpu.memory_space<vmem>>, vector<1x64xf32>
    %4 = vector.broadcast %3 : vector<1x64xf32> to vector<512x64xf32>
    %5 = arith.addf %2, %4 : vector<512x64xf32>
    %cst_5 = arith.constant 0.000000e+00 : f32
    %6 = vector.broadcast %cst_5 : f32 to vector<512x64xf32>
    %7 = arith.maximumf %5, %6 : vector<512x64xf32>
    %8 = arith.truncf %7 : vector<512x64xf32> to vector<512x64xbf16>
    %c0_6 = arith.constant 0 : index
    %c0_7 = arith.constant 0 : index
    %9 = vector.load %arg5[%c0_6, %c0_7] : memref<512x64xbf16, #tpu.memory_space<vmem>>, vector<512x64xbf16>
    tpu.vector_store %arg5[%c0_6, %c0_7], %8 {strides = array<i32>} : memref<512x64xbf16, #tpu.memory_space<vmem>>, vector<512x64xbf16>,
    return
  }
  func.func @transform_0(%arg0: i32, %arg1: i32) -> (i32, i32) {
    %c0_i32 = arith.constant 0 : i32
    %c0_i32_0 = arith.constant 0 : i32
    return %arg0, %c0_i32 : i32, i32
  }
  func.func @transform_1(%arg0: i32, %arg1: i32) -> (i32, i32) {
    %c0_i32 = arith.constant 0 : i32
    %c0_i32_0 = arith.constant 0 : i32
    return %c0_i32, %arg1 : i32, i32
  }
  func.func @transform_2(%arg0: i32, %arg1: i32) -> (i32, i32) {
    %c0_i32 = arith.constant 0 : i32
    %c0_i32_0 = arith.constant 0 : i32
    return %c0_i32, %arg1 : i32, i32
  }
  func.func @transform_3(%arg0: i32, %arg1: i32) -> (i32, i32) {
    %c0_i32 = arith.constant 0 : i32
    return %arg0, %arg1 : i32, i32
  }
}

</mosaic_0001>

<llo_original>
// kernel: matmul_affine.1
$region0: #{matmul_affine.1}
  #allocation0 [shape = 'u32[]', space=smem, size = 0x4, offset = 0x4, fixed_abs, tag = 'smem constant byte address 0x4 - core index']
  #allocation1 [shape = 'u32[72,128]{1,0:T(1,128)}', space=vmem, size = 0x9000, scoped, tag = 'internal scratch']
  %s0 = inlined_call_operand.hbm [shape: bf16[512,256], index: 0, kind: input, shape index: {}]
  %s1 = inlined_call_operand.vmem [shape: bf16[256,64], index: 1, kind: input, shape index: {}]
  %s2 = inlined_call_operand.vmem [shape: f32[1,64], index: 2, kind: input, shape index: {}]
  %s3 = inlined_call_operand.vmem [shape: bf16[512,64], index: 3, kind: output, shape index: {}]
  %s4 = sld [smem:[#allocation0]]
  $region26: #{matmul_affine.1} parent=0
    _
  %s6 = ssub.s32 1, %s4
  %s7 = scalar_select 0, %s6, %s4
  $region1: #{matmul_affine.1} parent=0
    #allocation2 [shape = 'u8[262144]{0}', space=vmem, size = 0x40000, scoped, tag = 'input window, operand 0, single buffered']
    #allocation3 [shape = 's32[1]{0}', space=sflag, size = 0x4, scoped, tag = 'scoped memory for matmul_affine.1']
    %8 = vsyncpa [#allocation3], 0
    // Predicated region
    $region2: #{matmul_affine.1} parent=1 // pred_check
      _
    $region3: #{matmul_affine.1} parent=1 // pred_check_branch
      %10 = sbr.rel (0) target = $region5
    $region4: #{matmul_affine.1} parent=1 // pred_region
      %12 = vsyncadd [#allocation3], 0
      %s13 = sshll.u32 %s0, 4
      %s14 = int_to_ptr.hbm [resolvable:$true] %s13
      %s15 = sshll.u32 [#allocation2], 4
      %s16 = int_to_ptr.vmem [resolvable:$true] %s15
      %21 = dma.hbm_to_vmem [thread:$0]  %s14, 8192, %s16, [#allocation3], 128, 128, 8
    $region5: #{matmul_affine.1} parent=1 // pred_fallthru
      _
    // Predicated region
    $region6: #{matmul_affine.1} parent=1 // pred_check
      _
    $region7: #{matmul_affine.1} parent=1 // pred_check_branch
      %23 = sbr.rel (0) target = $region9
    $region8: #{matmul_affine.1} parent=1 // pred_region
      _
    $region9: #{matmul_affine.1} parent=1 // pred_fallthru
      _
    // Predicated region
    $region10: #{matmul_affine.1} parent=1 // pred_check
      _
    $region11: #{matmul_affine.1} parent=1 // pred_check_branch
      %25 = sbr.rel (0) target = $region13
    $region12: #{matmul_affine.1} parent=1 // pred_region
      _
    $region13: #{matmul_affine.1} parent=1 // pred_fallthru
      _
    // Predicated region
    $region14: #{matmul_affine.1} parent=1 // pred_check
      _
    $region15: #{matmul_affine.1} parent=1 // pred_check_branch
      %27 = sbr.rel (0) target = $region17
    $region16: #{matmul_affine.1} parent=1 // pred_region
      %29 = dma.done [#allocation3], 8192
    $region17: #{matmul_affine.1} parent=1 // pred_fallthru
      _
    %v30 = vld [vmem:[#allocation2] sm:$0xff]
    %v31 = vld [vmem:[#allocation2 + $0x8] sm:$0xff]
    %v32 = vld [vmem:[#allocation2 + $0x10] sm:$0xff]
    %v33 = vld [vmem:[#allocation2 + $0x18] sm:$0xff]
    %v34 = vld [vmem:[#allocation2 + $0x20] sm:$0xff]
    %v35 = vld [vmem:[#allocation2 + $0x28] sm:$0xff]
    %v36 = vld [vmem:[#allocation2 + $0x30] sm:$0xff]
    %v37 = vld [vmem:[#allocation2 + $0x38] sm:$0xff]
    %v38 = vld [vmem:[#allocation2 + $0x40] sm:$0xff]
    %v39 = vld [vmem:[#allocation2 + $0x48] sm:$0xff]
    %v40 = vld [vmem:[#allocation2 + $0x50] sm:$0xff]
    %v41 = vld [vmem:[#allocation2 + $0x58] sm:$0xff]
    %v42 = vld [vmem:[#allocation2 + $0x60] sm:$0xff]
    %v43 = vld [vmem:[#allocation2 + $0x68] sm:$0xff]
    %v44 = vld [vmem:[#allocation2 + $0x70] sm:$0xff]
    %v45 = vld [vmem:[#allocation2 + $0x78] sm:$0xff]
    %v46 = vld [vmem:[#allocation2 + $0x80] sm:$0xff]
    %v47 = vld [vmem:[#allocation2 + $0x88] sm:$0xff]
    %v48 = vld [vmem:[#allocation2 + $0x90] sm:$0xff]
    %v49 = vld [vmem:[#allocation2 + $0x98] sm:$0xff]
    %v50 = vld [vmem:[#allocation2 + $0xa0] sm:$0xff]
    %v51 = vld [vmem:[#allocation2 + $0xa8] sm:$0xff]
    %v52 = vld [vmem:[#allocation2 + $0xb0] sm:$0xff]
    %v53 = vld [vmem:[#allocation2 + $0xb8] sm:$0xff]
    %v54 = vld [vmem:[#allocation2 + $0xc0] sm:$0xff]
    %v55 = vld [vmem:[#allocation2 + $0xc8] sm:$0xff]
    %v56 = vld [vmem:[#allocation2 + $0xd0] sm:$0xff]
    %v57 = vld [vmem:[#allocation2 + $0xd8] sm:$0xff]
    %v58 = vld [vmem:[#allocation2 + $0xe0] sm:$0xff]
    %v59 = vld [vmem:[#allocation2 + $0xe8] sm:$0xff]
    %v60 = vld [vmem:[#allocation2 + $0xf0] sm:$0xff]
    %v61 = vld [vmem:[#allocation2 + $0xf8] sm:$0xff]
    %v62 = vld [vmem:[#allocation2 + $0x100] sm:$0xff]
    %v63 = vld [vmem:[#allocation2 + $0x108] sm:$0xff]
    %v64 = vld [vmem:[#allocation2 + $0x110] sm:$0xff]
    %v65 = vld [vmem:[#allocation2 + $0x118] sm:$0xff]
    %v66 = vld [vmem:[#allocation2 + $0x120] sm:$0xff]
    %v67 = vld [vmem:[#allocation2 + $0x128] sm:$0xff]
    %v68 = vld [vmem:[#allocation2 + $0x130] sm:$0xff]
    %v69 = vld [vmem:[#allocation2 + $0x138] sm:$0xff]
    %v70 = vld [vmem:[#allocation2 + $0x140] sm:$0xff]
    %v71 = vld [vmem:[#allocation2 + $0x148] sm:$0xff]
    %v72 = vld [vmem:[#allocation2 + $0x150] sm:$0xff]
    %v73 = vld [vmem:[#allocation2 + $0x158] sm:$0xff]
    %v74 = vld [vmem:[#allocation2 + $0x160] sm:$0xff]
    %v75 = vld [vmem:[#allocation2 + $0x168] sm:$0xff]
    %v76 = vld [vmem:[#allocation2 + $0x170] sm:$0xff]
    %v77 = vld [vmem:[#allocation2 + $0x178] sm:$0xff]
    %v78 = vld [vmem:[#allocation2 + $0x180] sm:$0xff]
    %v79 = vld [vmem:[#allocation2 + $0x188] sm:$0xff]
    %v80 = vld [vmem:[#allocation2 + $0x190] sm:$0xff]
    %v81 = vld [vmem:[#allocation2 + $0x198] sm:$0xff]
    %v82 = vld [vmem:[#allocation2 + $0x1a0] sm:$0xff]
    %v83 = vld [vmem:[#allocation2 + $0x1a8] sm:$0xff]
    %v84 = vld [vmem:[#allocation2 + $0x1b0] sm:$0xff]
    %v85 = vld [vmem:[#allocation2 + $0x1b8] sm:$0xff]
    %v86 = vld [vmem:[#allocation2 + $0x1c0] sm:$0xff]
    %v87 = vld [vmem:[#allocation2 + $0x1c8] sm:$0xff]
    %v88 = vld [vmem:[#allocation2 + $0x1d0] sm:$0xff]
    %v89 = vld [vmem:[#allocation2 + $0x1d8] sm:$0xff]
    %v90 = vld [vmem:[#allocation2 + $0x1e0] sm:$0xff]
    %v91 = vld [vmem:[#allocation2 + $0x1e8] sm:$0xff]
    %v92 = vld [vmem:[#allocation2 + $0x1f0] sm:$0xff]
    %v93 = vld [vmem:[#allocation2 + $0x1f8] sm:$0xff]
    %v94 = vld [vmem:[%s1] sm:$0xf]
    %v95 = vld [vmem:[%s1 + $0x4] sm:$0xf]
    %v96 = vld [vmem:[%s1 + $0x8] sm:$0xf]
    %v97 = vld [vmem:[%s1 + $0xc] sm:$0xf]
    %v98 = vld [vmem:[%s1 + $0x10] sm:$0xf]
    %v99 = vld [vmem:[%s1 + $0x14] sm:$0xf]
    %v100 = vld [vmem:[%s1 + $0x18] sm:$0xf]
    %v101 = vld [vmem:[%s1 + $0x1c] sm:$0xf]
    %v102 = vld [vmem:[%s1 + $0x20] sm:$0xf]
    %v103 = vld [vmem:[%s1 + $0x24] sm:$0xf]
    %v104 = vld [vmem:[%s1 + $0x28] sm:$0xf]
    %v105 = vld [vmem:[%s1 + $0x2c] sm:$0xf]
    %v106 = vld [vmem:[%s1 + $0x30] sm:$0xf]
    %v107 = vld [vmem:[%s1 + $0x34] sm:$0xf]
    %v108 = vld [vmem:[%s1 + $0x38] sm:$0xf]
    %v109 = vld [vmem:[%s1 + $0x3c] sm:$0xf]
    %v110 = vld [vmem:[%s1 + $0x40] sm:$0xf]
    %v111 = vld [vmem:[%s1 + $0x44] sm:$0xf]
    %v112 = vld [vmem:[%s1 + $0x48] sm:$0xf]
    %v113 = vld [vmem:[%s1 + $0x4c] sm:$0xf]
    %v114 = vld [vmem:[%s1 + $0x50] sm:$0xf]
    %v115 = vld [vmem:[%s1 + $0x54] sm:$0xf]
    %v116 = vld [vmem:[%s1 + $0x58] sm:$0xf]
    %v117 = vld [vmem:[%s1 + $0x5c] sm:$0xf]
    %v118 = vld [vmem:[%s1 + $0x60] sm:$0xf]
    %v119 = vld [vmem:[%s1 + $0x64] sm:$0xf]
    %v120 = vld [vmem:[%s1 + $0x68] sm:$0xf]
    %v121 = vld [vmem:[%s1 + $0x6c] sm:$0xf]
    %v122 = vld [vmem:[%s1 + $0x70] sm:$0xf]
    %v123 = vld [vmem:[%s1 + $0x74] sm:$0xf]
    %v124 = vld [vmem:[%s1 + $0x78] sm:$0xf]
    %v125 = vld [vmem:[%s1 + $0x7c] sm:$0xf]
    %v126 = vld [vmem:[%s2] sm:$0x1]
    %v128 = vperm.slane %v126, 0
    %v194 = vunpack.c.l.b16 %v30
    %v195 = vunpack.c.h.b16 %v30
    %v196 = vunpack.c.l.b16 %v31
    %v197 = vunpack.c.h.b16 %v31
    %v198 = vunpack.c.l.b16 %v32
    %v199 = vunpack.c.h.b16 %v32
    %v200 = vunpack.c.l.b16 %v33
    %v201 = vunpack.c.h.b16 %v33
    %v202 = vunpack.c.l.b16 %v34
    %v203 = vunpack.c.h.b16 %v34
    %v204 = vunpack.c.l.b16 %v35
    %v205 = vunpack.c.h.b16 %v35
    %v206 = vunpack.c.l.b16 %v36
    %v207 = vunpack.c.h.b16 %v36
    %v208 = vunpack.c.l.b16 %v37
    %v209 = vunpack.c.h.b16 %v37
    %v210 = vunpack.c.l.b16 %v38
    %v211 = vunpack.c.h.b16 %v38
    %v212 = vunpack.c.l.b16 %v39
    %v213 = vunpack.c.h.b16 %v39
    %v214 = vunpack.c.l.b16 %v40
    %v215 = vunpack.c.h.b16 %v40
    %v216 = vunpack.c.l.b16 %v41
    %v217 = vunpack.c.h.b16 %v41
    %v218 = vunpack.c.l.b16 %v42
    %v219 = vunpack.c.h.b16 %v42
    %v220 = vunpack.c.l.b16 %v43
    %v221 = vunpack.c.h.b16 %v43
    %v222 = vunpack.c.l.b16 %v44
    %v223 = vunpack.c.h.b16 %v44
    %v224 = vunpack.c.l.b16 %v45
    %v225 = vunpack.c.h.b16 %v45
    %v226 = vunpack.c.l.b16 %v46
    %v227 = vunpack.c.h.b16 %v46
    %v228 = vunpack.c.l.b16 %v47
    %v229 = vunpack.c.h.b16 %v47
    %v230 = vunpack.c.l.b16 %v48
    %v231 = vunpack.c.h.b16 %v48
    %v232 = vunpack.c.l.b16 %v49
    %v233 = vunpack.c.h.b16 %v49
    %v234 = vunpack.c.l.b16 %v50
    %v235 = vunpack.c.h.b16 %v50
    %v236 = vunpack.c.l.b16 %v51
    %v237 = vunpack.c.h.b16 %v51
    %v238 = vunpack.c.l.b16 %v52
    %v239 = vunpack.c.h.b16 %v52
    %v240 = vunpack.c.l.b16 %v53
    %v241 = vunpack.c.h.b16 %v53
    %v242 = vunpack.c.l.b16 %v54
    %v243 = vunpack.c.h.b16 %v54
    %v244 = vunpack.c.l.b16 %v55
    %v245 = vunpack.c.h.b16 %v55
    %v246 = vunpack.c.l.b16 %v56
    %v247 = vunpack.c.h.b16 %v56
    %v248 = vunpack.c.l.b16 %v57
    %v249 = vunpack.c.h.b16 %v57
    %v250 = vunpack.c.l.b16 %v58
    %v251 = vunpack.c.h.b16 %v58
    %v252 = vunpack.c.l.b16 %v59
    %v253 = vunpack.c.h.b16 %v59
    %v254 = vunpack.c.l.b16 %v60
    %v255 = vunpack.c.h.b16 %v60
    %v256 = vunpack.c.l.b16 %v61
    %v257 = vunpack.c.h.b16 %v61
    %v258 = vunpack.c.l.b16 %v62
    %v259 = vunpack.c.h.b16 %v62
    %v260 = vunpack.c.l.b16 %v63
    %v261 = vunpack.c.h.b16 %v63
    %v262 = vunpack.c.l.b16 %v64
    %v263 = vunpack.c.h.b16 %v64
    %v264 = vunpack.c.l.b16 %v65
    %v265 = vunpack.c.h.b16 %v65
    %v266 = vunpack.c.l.b16 %v66
    %v267 = vunpack.c.h.b16 %v66
    %v268 = vunpack.c.l.b16 %v67
    %v269 = vunpack.c.h.b16 %v67
    %v270 = vunpack.c.l.b16 %v68
    %v271 = vunpack.c.h.b16 %v68
    %v272 = vunpack.c.l.b16 %v69
    %v273 = vunpack.c.h.b16 %v69
    %v274 = vunpack.c.l.b16 %v70
    %v275 = vunpack.c.h.b16 %v70
    %v276 = vunpack.c.l.b16 %v71
    %v277 = vunpack.c.h.b16 %v71
    %v278 = vunpack.c.l.b16 %v72
    %v279 = vunpack.c.h.b16 %v72
    %v280 = vunpack.c.l.b16 %v73
    %v281 = vunpack.c.h.b16 %v73
    %v282 = vunpack.c.l.b16 %v74
    %v283 = vunpack.c.h.b16 %v74
    %v284 = vunpack.c.l.b16 %v75
    %v285 = vunpack.c.h.b16 %v75
    %v286 = vunpack.c.l.b16 %v76
    %v287 = vunpack.c.h.b16 %v76
    %v288 = vunpack.c.l.b16 %v77
    %v289 = vunpack.c.h.b16 %v77
    %v290 = vunpack.c.l.b16 %v78
    %v291 = vunpack.c.h.b16 %v78
    %v292 = vunpack.c.l.b16 %v79
    %v293 = vunpack.c.h.b16 %v79
    %v294 = vunpack.c.l.b16 %v80
    %v295 = vunpack.c.h.b16 %v80
    %v296 = vunpack.c.l.b16 %v81
    %v297 = vunpack.c.h.b16 %v81
    %v298 = vunpack.c.l.b16 %v82
    %v299 = vunpack.c.h.b16 %v82
    %v300 = vunpack.c.l.b16 %v83
    %v301 = vunpack.c.h.b16 %v83
    %v302 = vunpack.c.l.b16 %v84
    %v303 = vunpack.c.h.b16 %v84
    %v304 = vunpack.c.l.b16 %v85
    %v305 = vunpack.c.h.b16 %v85
    %v306 = vunpack.c.l.b16 %v86
    %v307 = vunpack.c.h.b16 %v86
    %v308 = vunpack.c.l.b16 %v87
    %v309 = vunpack.c.h.b16 %v87
    %v310 = vunpack.c.l.b16 %v88
    %v311 = vunpack.c.h.b16 %v88
    %v312 = vunpack.c.l.b16 %v89
    %v313 = vunpack.c.h.b16 %v89
    %v314 = vunpack.c.l.b16 %v90
    %v315 = vunpack.c.h.b16 %v90
    %v316 = vunpack.c.l.b16 %v91
    %v317 = vunpack.c.h.b16 %v91
    %v318 = vunpack.c.l.b16 %v92
    %v319 = vunpack.c.h.b16 %v92
    %v320 = vunpack.c.l.b16 %v93
    %v321 = vunpack.c.h.b16 %v93
    %v322 = vpack.c.b16 %v196, %v194
    %v323 = vpack.c.b16 %v197, %v195
    %v324 = vpack.c.b16 %v200, %v198
    %v325 = vpack.c.b16 %v201, %v199
    %v326 = vpack.c.b16 %v204, %v202
    %v327 = vpack.c.b16 %v205, %v203
    %v328 = vpack.c.b16 %v208, %v206
    %v329 = vpack.c.b16 %v209, %v207
    %v330 = vpack.c.b16 %v212, %v210
    %v331 = vpack.c.b16 %v213, %v211
    %v332 = vpack.c.b16 %v216, %v214
    %v333 = vpack.c.b16 %v217, %v215
    %v334 = vpack.c.b16 %v220, %v218
    %v335 = vpack.c.b16 %v221, %v219
    %v336 = vpack.c.b16 %v224, %v222
    %v337 = vpack.c.b16 %v225, %v223
    %v338 = vpack.c.b16 %v228, %v226
    %v339 = vpack.c.b16 %v229, %v227
    %v340 = vpack.c.b16 %v232, %v230
    %v341 = vpack.c.b16 %v233, %v231
    %v342 = vpack.c.b16 %v236, %v234
    %v343 = vpack.c.b16 %v237, %v235
    %v344 = vpack.c.b16 %v240, %v238
    %v345 = vpack.c.b16 %v241, %v239
    %v346 = vpack.c.b16 %v244, %v242
    %v347 = vpack.c.b16 %v245, %v243
    %v348 = vpack.c.b16 %v248, %v246
    %v349 = vpack.c.b16 %v249, %v247
    %v350 = vpack.c.b16 %v252, %v250
    %v351 = vpack.c.b16 %v253, %v251
    %v352 = vpack.c.b16 %v256, %v254
    %v353 = vpack.c.b16 %v257, %v255
    %v354 = vpack.c.b16 %v260, %v258
    %v355 = vpack.c.b16 %v261, %v259
    %v356 = vpack.c.b16 %v264, %v262
    %v357 = vpack.c.b16 %v265, %v263
    %v358 = vpack.c.b16 %v268, %v266
    %v359 = vpack.c.b16 %v269, %v267
    %v360 = vpack.c.b16 %v272, %v270
    %v361 = vpack.c.b16 %v273, %v271
    %v362 = vpack.c.b16 %v276, %v274
    %v363 = vpack.c.b16 %v277, %v275
    %v364 = vpack.c.b16 %v280, %v278
    %v365 = vpack.c.b16 %v281, %v279
    %v366 = vpack.c.b16 %v284, %v282
    %v367 = vpack.c.b16 %v285, %v283
    %v368 = vpack.c.b16 %v288, %v286
    %v369 = vpack.c.b16 %v289, %v287
    %v370 = vpack.c.b16 %v292, %v290
    %v371 = vpack.c.b16 %v293, %v291
    %v372 = vpack.c.b16 %v296, %v294
    %v373 = vpack.c.b16 %v297, %v295
    %v374 = vpack.c.b16 %v300, %v298
    %v375 = vpack.c.b16 %v301, %v299
    %v376 = vpack.c.b16 %v304, %v302
    %v377 = vpack.c.b16 %v305, %v303
    %v378 = vpack.c.b16 %v308, %v306
    %v379 = vpack.c.b16 %v309, %v307
    %v380 = vpack.c.b16 %v312, %v310
    %v381 = vpack.c.b16 %v313, %v311
    %v382 = vpack.c.b16 %v316, %v314
    %v383 = vpack.c.b16 %v317, %v315
    %v384 = vpack.c.b16 %v320, %v318
    %v385 = vpack.c.b16 %v321, %v319
    %v482 = vunpack.c.l.b16 %v94
    %v483 = vunpack.c.l.b16 %v95
    %v484 = vunpack.c.l.b16 %v96
    %v485 = vunpack.c.l.b16 %v97
    %v486 = vunpack.c.l.b16 %v98
    %v487 = vunpack.c.l.b16 %v99
    %v488 = vunpack.c.l.b16 %v100
    %v489 = vunpack.c.l.b16 %v101
    %v490 = vunpack.c.l.b16 %v102
    %v491 = vunpack.c.l.b16 %v103
    %v492 = vunpack.c.l.b16 %v104
    %v493 = vunpack.c.l.b16 %v105
    %v494 = vunpack.c.l.b16 %v106
    %v495 = vunpack.c.l.b16 %v107
    %v496 = vunpack.c.l.b16 %v108
    %v497 = vunpack.c.l.b16 %v109
    %v498 = vunpack.c.l.b16 %v110
    %v499 = vunpack.c.l.b16 %v111
    %v500 = vunpack.c.l.b16 %v112
    %v501 = vunpack.c.l.b16 %v113
    %v502 = vunpack.c.l.b16 %v114
    %v503 = vunpack.c.l.b16 %v115
    %v504 = vunpack.c.l.b16 %v116
    %v505 = vunpack.c.l.b16 %v117
    %v506 = vunpack.c.l.b16 %v118
    %v507 = vunpack.c.l.b16 %v119
    %v508 = vunpack.c.l.b16 %v120
    %v509 = vunpack.c.l.b16 %v121
    %v510 = vunpack.c.l.b16 %v122
    %v511 = vunpack.c.l.b16 %v123
    %v512 = vunpack.c.l.b16 %v124
    %v513 = vunpack.c.l.b16 %v125
    %v514 = vpack.c.b16 %v483, %v482
    %v515 = vpack.c.b16 %v485, %v484
    %v516 = vpack.c.b16 %v487, %v486
    %v517 = vpack.c.b16 %v489, %v488
    %v518 = vpack.c.b16 %v491, %v490
    %v519 = vpack.c.b16 %v493, %v492
    %v520 = vpack.c.b16 %v495, %v494
    %v521 = vpack.c.b16 %v497, %v496
    %v522 = vpack.c.b16 %v499, %v498
    %v523 = vpack.c.b16 %v501, %v500
    %v524 = vpack.c.b16 %v503, %v502
    %v525 = vpack.c.b16 %v505, %v504
    %v526 = vpack.c.b16 %v507, %v506
    %v527 = vpack.c.b16 %v509, %v508
    %v528 = vpack.c.b16 %v511, %v510
    %v529 = vpack.c.b16 %v513, %v512
    %546 = vmatpush.bf16.msra.mxu0 %v521
    %547 = vmatpush.bf16.msra.mxu0 %v520
    %548 = vmatpush.bf16.msra.mxu0 %v519
    %549 = vmatpush.bf16.msra.mxu0 %v518
    %550 = vmatpush.bf16.msra.mxu0 %v517
    %551 = vmatpush.bf16.msra.mxu0 %v516
    %552 = vmatpush.bf16.msra.mxu0 %v515
    %553 = vmatpush.bf16.msra.mxu0 %v514
    %554 = vmatmul.bf16.gmra.mxu0 %v322
    %v555 = vpop.f32.mrf.mxu0
    %v556 = vadd.f32 %v128, %v555
    %v557 = vpop.f32.mrf.mxu0
    %v558 = vadd.f32 %v128, %v557
    %559 = vmatmul.bf16.gmra.mxu0 %v324
    %v560 = vpop.f32.mrf.mxu0
    %v561 = vadd.f32 %v128, %v560
    %v562 = vpop.f32.mrf.mxu0
    %v563 = vadd.f32 %v128, %v562
    %564 = vmatmul.bf16.gmra.mxu0 %v326
    %v565 = vpop.f32.mrf.mxu0
    %v566 = vadd.f32 %v128, %v565
    %v567 = vpop.f32.mrf.mxu0
    %v568 = vadd.f32 %v128, %v567
    %569 = vmatmul.bf16.gmra.mxu0 %v328
    %v570 = vpop.f32.mrf.mxu0
    %v571 = vadd.f32 %v128, %v570
    %v572 = vpop.f32.mrf.mxu0
    %v573 = vadd.f32 %v128, %v572
    %574 = vmatmul.bf16.gmra.mxu0 %v330
    %v575 = vpop.f32.mrf.mxu0
    %v576 = vadd.f32 %v128, %v575
    %v577 = vpop.f32.mrf.mxu0
    %v578 = vadd.f32 %v128, %v577
    %579 = vmatmul.bf16.gmra.mxu0 %v332
    %v580 = vpop.f32.mrf.mxu0
    %v581 = vadd.f32 %v128, %v580
    %v582 = vpop.f32.mrf.mxu0
    %v583 = vadd.f32 %v128, %v582
    %584 = vmatmul.bf16.gmra.mxu0 %v334
    %v585 = vpop.f32.mrf.mxu0
    %v586 = vadd.f32 %v128, %v585
    %v587 = vpop.f32.mrf.mxu0
    %v588 = vadd.f32 %v128, %v587
    %589 = vmatmul.bf16.gmra.mxu0 %v336
    %v590 = vpop.f32.mrf.mxu0
    %v591 = vadd.f32 %v128, %v590
    %v592 = vpop.f32.mrf.mxu0
    %v593 = vadd.f32 %v128, %v592
    %594 = vmatmul.bf16.gmra.mxu0 %v338
    %v595 = vpop.f32.mrf.mxu0
    %v596 = vadd.f32 %v128, %v595
    %v597 = vpop.f32.mrf.mxu0
    %v598 = vadd.f32 %v128, %v597
    %599 = vmatmul.bf16.gmra.mxu0 %v340
    %v600 = vpop.f32.mrf.mxu0
    %v601 = vadd.f32 %v128, %v600
    %v602 = vpop.f32.mrf.mxu0
    %v603 = vadd.f32 %v128, %v602
    %604 = vmatmul.bf16.gmra.mxu0 %v342
    %v605 = vpop.f32.mrf.mxu0
    %v606 = vadd.f32 %v128, %v605
    %v607 = vpop.f32.mrf.mxu0
    %v608 = vadd.f32 %v128, %v607
    %609 = vmatmul.bf16.gmra.mxu0 %v344
    %v610 = vpop.f32.mrf.mxu0
    %v611 = vadd.f32 %v128, %v610
    %v612 = vpop.f32.mrf.mxu0
    %v613 = vadd.f32 %v128, %v612
    %614 = vmatmul.bf16.gmra.mxu0 %v346
    %v615 = vpop.f32.mrf.mxu0
    %v616 = vadd.f32 %v128, %v615
    %v617 = vpop.f32.mrf.mxu0
    %v618 = vadd.f32 %v128, %v617
    %619 = vmatmul.bf16.gmra.mxu0 %v348
    %v620 = vpop.f32.mrf.mxu0
    %v621 = vadd.f32 %v128, %v620
    %v622 = vpop.f32.mrf.mxu0
    %v623 = vadd.f32 %v128, %v622
    %624 = vmatmul.bf16.gmra.mxu0 %v350
    %v625 = vpop.f32.mrf.mxu0
    %v626 = vadd.f32 %v128, %v625
    %v627 = vpop.f32.mrf.mxu0
    %v628 = vadd.f32 %v128, %v627
    %629 = vmatmul.bf16.gmra.mxu0 %v352
    %v630 = vpop.f32.mrf.mxu0
    %v631 = vadd.f32 %v128, %v630
    %v632 = vpop.f32.mrf.mxu0
    %v633 = vadd.f32 %v128, %v632
    %634 = vmatmul.bf16.gmra.mxu0 %v354
    %v635 = vpop.f32.mrf.mxu0
    %v636 = vadd.f32 %v128, %v635
    %v637 = vpop.f32.mrf.mxu0
    %v638 = vadd.f32 %v128, %v637
    %639 = vmatmul.bf16.gmra.mxu0 %v356
    %v640 = vpop.f32.mrf.mxu0
    %v641 = vadd.f32 %v128, %v640
    %v642 = vpop.f32.mrf.mxu0
    %v643 = vadd.f32 %v128, %v642
    %644 = vmatmul.bf16.gmra.mxu0 %v358
    %v645 = vpop.f32.mrf.mxu0
    %v646 = vadd.f32 %v128, %v645
    %v647 = vpop.f32.mrf.mxu0
    %v648 = vadd.f32 %v128, %v647
    %649 = vmatmul.bf16.gmra.mxu0 %v360
    %v650 = vpop.f32.mrf.mxu0
    %v651 = vadd.f32 %v128, %v650
    %v652 = vpop.f32.mrf.mxu0
    %v653 = vadd.f32 %v128, %v652
    %654 = vmatmul.bf16.gmra.mxu0 %v362
    %v655 = vpop.f32.mrf.mxu0
    %v656 = vadd.f32 %v128, %v655
    %v657 = vpop.f32.mrf.mxu0
    %v658 = vadd.f32 %v128, %v657
    %659 = vmatmul.bf16.gmra.mxu0 %v364
    %v660 = vpop.f32.mrf.mxu0
    %v661 = vadd.f32 %v128, %v660
    %v662 = vpop.f32.mrf.mxu0
    %v663 = vadd.f32 %v128, %v662
    %664 = vmatmul.bf16.gmra.mxu0 %v366
    %v665 = vpop.f32.mrf.mxu0
    %v666 = vadd.f32 %v128, %v665
    %v667 = vpop.f32.mrf.mxu0
    %v668 = vadd.f32 %v128, %v667
    %669 = vmatmul.bf16.gmra.mxu0 %v368
    %v670 = vpop.f32.mrf.mxu0
    %v671 = vadd.f32 %v128, %v670
    %v672 = vpop.f32.mrf.mxu0
    %v673 = vadd.f32 %v128, %v672
    %674 = vmatmul.bf16.gmra.mxu0 %v370
    %v675 = vpop.f32.mrf.mxu0
    %v676 = vadd.f32 %v128, %v675
    %v677 = vpop.f32.mrf.mxu0
    %v678 = vadd.f32 %v128, %v677
    %679 = vmatmul.bf16.gmra.mxu0 %v372
    %v680 = vpop.f32.mrf.mxu0
    %v681 = vadd.f32 %v128, %v680
    %v682 = vpop.f32.mrf.mxu0
    %v683 = vadd.f32 %v128, %v682
    %684 = vmatmul.bf16.gmra.mxu0 %v374
    %v685 = vpop.f32.mrf.mxu0
    %v686 = vadd.f32 %v128, %v685
    %v687 = vpop.f32.mrf.mxu0
    %v688 = vadd.f32 %v128, %v687
    %689 = vmatmul.bf16.gmra.mxu0 %v376
    %v690 = vpop.f32.mrf.mxu0
    %v691 = vadd.f32 %v128, %v690
    %v692 = vpop.f32.mrf.mxu0
    %v693 = vadd.f32 %v128, %v692
    %694 = vmatmul.bf16.gmra.mxu0 %v378
    %v695 = vpop.f32.mrf.mxu0
    %v696 = vadd.f32 %v128, %v695
    %v697 = vpop.f32.mrf.mxu0
    %v698 = vadd.f32 %v128, %v697
    %699 = vmatmul.bf16.gmra.mxu0 %v380
    %v700 = vpop.f32.mrf.mxu0
    %v701 = vadd.f32 %v128, %v700
    %v702 = vpop.f32.mrf.mxu0
    %v703 = vadd.f32 %v128, %v702
    %704 = vmatmul.bf16.gmra.mxu0 %v382
    %v705 = vpop.f32.mrf.mxu0
    %v706 = vadd.f32 %v128, %v705
    %v707 = vpop.f32.mrf.mxu0
    %v708 = vadd.f32 %v128, %v707
    %709 = vmatmul.bf16.gmra.mxu0 %v384
    %v710 = vpop.f32.mrf.mxu0
    %v711 = vadd.f32 %v128, %v710
    %v712 = vpop.f32.mrf.mxu0
    %v713 = vadd.f32 %v128, %v712
    %714 = vdwg.mxu0
    %715 = vmatpush.bf16.msra.mxu0 %v529
    %716 = vmatpush.bf16.msra.mxu0 %v528
    %717 = vmatpush.bf16.msra.mxu0 %v527
    %718 = vmatpush.bf16.msra.mxu0 %v526
    %719 = vmatpush.bf16.msra.mxu0 %v525
    %720 = vmatpush.bf16.msra.mxu0 %v524
    %721 = vmatpush.bf16.msra.mxu0 %v523
    %722 = vmatpush.bf16.msra.mxu0 %v522
    %723 = vmatmul.bf16.gmra.mxu0 %v323
    %v724 = vpop.f32.mrf.mxu0
    %v725 = vadd.f32 %v556, %v724
    %v726 = vpop.f32.mrf.mxu0
    %v727 = vadd.f32 %v558, %v726
    %728 = vmatmul.bf16.gmra.mxu0 %v325
    %v729 = vpop.f32.mrf.mxu0
    %v730 = vadd.f32 %v561, %v729
    %v731 = vpop.f32.mrf.mxu0
    %v732 = vadd.f32 %v563, %v731
    %733 = vmatmul.bf16.gmra.mxu0 %v327
    %v734 = vpop.f32.mrf.mxu0
    %v735 = vadd.f32 %v566, %v734
    %v736 = vpop.f32.mrf.mxu0
    %v737 = vadd.f32 %v568, %v736
    %738 = vmatmul.bf16.gmra.mxu0 %v329
    %v739 = vpop.f32.mrf.mxu0
    %v740 = vadd.f32 %v571, %v739
    %v741 = vpop.f32.mrf.mxu0
    %v742 = vadd.f32 %v573, %v741
    %743 = vmatmul.bf16.gmra.mxu0 %v331
    %v744 = vpop.f32.mrf.mxu0
    %v745 = vadd.f32 %v576, %v744
    %v746 = vpop.f32.mrf.mxu0
    %v747 = vadd.f32 %v578, %v746
    %748 = vmatmul.bf16.gmra.mxu0 %v333
    %v749 = vpop.f32.mrf.mxu0
    %v750 = vadd.f32 %v581, %v749
    %v751 = vpop.f32.mrf.mxu0
    %v752 = vadd.f32 %v583, %v751
    %753 = vmatmul.bf16.gmra.mxu0 %v335
    %v754 = vpop.f32.mrf.mxu0
    %v755 = vadd.f32 %v586, %v754
    %v756 = vpop.f32.mrf.mxu0
    %v757 = vadd.f32 %v588, %v756
    %758 = vmatmul.bf16.gmra.mxu0 %v337
    %v759 = vpop.f32.mrf.mxu0
    %v760 = vadd.f32 %v591, %v759
    %v761 = vpop.f32.mrf.mxu0
    %v762 = vadd.f32 %v593, %v761
    %763 = vmatmul.bf16.gmra.mxu0 %v339
    %v764 = vpop.f32.mrf.mxu0
    %v765 = vadd.f32 %v596, %v764
    %v766 = vpop.f32.mrf.mxu0
    %v767 = vadd.f32 %v598, %v766
    %768 = vmatmul.bf16.gmra.mxu0 %v341
    %v769 = vpop.f32.mrf.mxu0
    %v770 = vadd.f32 %v601, %v769
    %v771 = vpop.f32.mrf.mxu0
    %v772 = vadd.f32 %v603, %v771
    %773 = vmatmul.bf16.gmra.mxu0 %v343
    %v774 = vpop.f32.mrf.mxu0
    %v775 = vadd.f32 %v606, %v774
    %v776 = vpop.f32.mrf.mxu0
    %v777 = vadd.f32 %v608, %v776
    %778 = vmatmul.bf16.gmra.mxu0 %v345
    %v779 = vpop.f32.mrf.mxu0
    %v780 = vadd.f32 %v611, %v779
    %v781 = vpop.f32.mrf.mxu0
    %v782 = vadd.f32 %v613, %v781
    %783 = vmatmul.bf16.gmra.mxu0 %v347
    %v784 = vpop.f32.mrf.mxu0
    %v785 = vadd.f32 %v616, %v784
    %v786 = vpop.f32.mrf.mxu0
    %v787 = vadd.f32 %v618, %v786
    %788 = vmatmul.bf16.gmra.mxu0 %v349
    %v789 = vpop.f32.mrf.mxu0
    %v790 = vadd.f32 %v621, %v789
    %v791 = vpop.f32.mrf.mxu0
    %v792 = vadd.f32 %v623, %v791
    %793 = vmatmul.bf16.gmra.mxu0 %v351
    %v794 = vpop.f32.mrf.mxu0
    %v795 = vadd.f32 %v626, %v794
    %v796 = vpop.f32.mrf.mxu0
    %v797 = vadd.f32 %v628, %v796
    %798 = vmatmul.bf16.gmra.mxu0 %v353
    %v799 = vpop.f32.mrf.mxu0
    %v800 = vadd.f32 %v631, %v799
    %v801 = vpop.f32.mrf.mxu0
    %v802 = vadd.f32 %v633, %v801
    %803 = vmatmul.bf16.gmra.mxu0 %v355
    %v804 = vpop.f32.mrf.mxu0
    %v805 = vadd.f32 %v636, %v804
    %v806 = vpop.f32.mrf.mxu0
    %v807 = vadd.f32 %v638, %v806
    %808 = vmatmul.bf16.gmra.mxu0 %v357
    %v809 = vpop.f32.mrf.mxu0
    %v810 = vadd.f32 %v641, %v809
    %v811 = vpop.f32.mrf.mxu0
    %v812 = vadd.f32 %v643, %v811
    %813 = vmatmul.bf16.gmra.mxu0 %v359
    %v814 = vpop.f32.mrf.mxu0
    %v815 = vadd.f32 %v646, %v814
    %v816 = vpop.f32.mrf.mxu0
    %v817 = vadd.f32 %v648, %v816
    %818 = vmatmul.bf16.gmra.mxu0 %v361
    %v819 = vpop.f32.mrf.mxu0
    %v820 = vadd.f32 %v651, %v819
    %v821 = vpop.f32.mrf.mxu0
    %v822 = vadd.f32 %v653, %v821
    %823 = vmatmul.bf16.gmra.mxu0 %v363
    %v824 = vpop.f32.mrf.mxu0
    %v825 = vadd.f32 %v656, %v824
    %v826 = vpop.f32.mrf.mxu0
    %v827 = vadd.f32 %v658, %v826
    %828 = vmatmul.bf16.gmra.mxu0 %v365
    %v829 = vpop.f32.mrf.mxu0
    %v830 = vadd.f32 %v661, %v829
    %v831 = vpop.f32.mrf.mxu0
    %v832 = vadd.f32 %v663, %v831
    %833 = vmatmul.bf16.gmra.mxu0 %v367
    %v834 = vpop.f32.mrf.mxu0
    %v835 = vadd.f32 %v666, %v834
    %v836 = vpop.f32.mrf.mxu0
    %v837 = vadd.f32 %v668, %v836
    %838 = vmatmul.bf16.gmra.mxu0 %v369
    %v839 = vpop.f32.mrf.mxu0
    %v840 = vadd.f32 %v671, %v839
    %v841 = vpop.f32.mrf.mxu0
    %v842 = vadd.f32 %v673, %v841
    %843 = vmatmul.bf16.gmra.mxu0 %v371
    %v844 = vpop.f32.mrf.mxu0
    %v845 = vadd.f32 %v676, %v844
    %v846 = vpop.f32.mrf.mxu0
    %v847 = vadd.f32 %v678, %v846
    %848 = vmatmul.bf16.gmra.mxu0 %v373
    %v849 = vpop.f32.mrf.mxu0
    %v850 = vadd.f32 %v681, %v849
    %v851 = vpop.f32.mrf.mxu0
    %v852 = vadd.f32 %v683, %v851
    %853 = vmatmul.bf16.gmra.mxu0 %v375
    %v854 = vpop.f32.mrf.mxu0
    %v855 = vadd.f32 %v686, %v854
    %v856 = vpop.f32.mrf.mxu0
    %v857 = vadd.f32 %v688, %v856
    %858 = vmatmul.bf16.gmra.mxu0 %v377
    %v859 = vpop.f32.mrf.mxu0
    %v860 = vadd.f32 %v691, %v859
    %v861 = vpop.f32.mrf.mxu0
    %v862 = vadd.f32 %v693, %v861
    %863 = vmatmul.bf16.gmra.mxu0 %v379
    %v864 = vpop.f32.mrf.mxu0
    %v865 = vadd.f32 %v696, %v864
    %v866 = vpop.f32.mrf.mxu0
    %v867 = vadd.f32 %v698, %v866
    %868 = vmatmul.bf16.gmra.mxu0 %v381
    %v869 = vpop.f32.mrf.mxu0
    %v870 = vadd.f32 %v701, %v869
    %v871 = vpop.f32.mrf.mxu0
    %v872 = vadd.f32 %v703, %v871
    %873 = vmatmul.bf16.gmra.mxu0 %v383
    %v874 = vpop.f32.mrf.mxu0
    %v875 = vadd.f32 %v706, %v874
    %v876 = vpop.f32.mrf.mxu0
    %v877 = vadd.f32 %v708, %v876
    %878 = vmatmul.bf16.gmra.mxu0 %v385
    %v879 = vpop.f32.mrf.mxu0
    %v880 = vadd.f32 %v711, %v879
    %v881 = vpop.f32.mrf.mxu0
    %v882 = vadd.f32 %v713, %v881
    %883 = vdwg.mxu0
    %v884 = vmax.f32 %v725, 0.0
    %v885 = vmax.f32 %v727, 0.0
    %v886 = vmax.f32 %v730, 0.0
    %v887 = vmax.f32 %v732, 0.0
    %v888 = vmax.f32 %v735, 0.0
    %v889 = vmax.f32 %v737, 0.0
    %v890 = vmax.f32 %v740, 0.0
    %v891 = vmax.f32 %v742, 0.0
    %v892 = vmax.f32 %v745, 0.0
    %v893 = vmax.f32 %v747, 0.0
    %v894 = vmax.f32 %v750, 0.0
    %v895 = vmax.f32 %v752, 0.0
    %v896 = vmax.f32 %v755, 0.0
    %v897 = vmax.f32 %v757, 0.0
    %v898 = vmax.f32 %v760, 0.0
    %v899 = vmax.f32 %v762, 0.0
    %v900 = vmax.f32 %v765, 0.0
    %v901 = vmax.f32 %v767, 0.0
    %v902 = vmax.f32 %v770, 0.0
    %v903 = vmax.f32 %v772, 0.0
    %v904 = vmax.f32 %v775, 0.0
    %v905 = vmax.f32 %v777, 0.0
    %v906 = vmax.f32 %v780, 0.0
    %v907 = vmax.f32 %v782, 0.0
    %v908 = vmax.f32 %v785, 0.0
    %v909 = vmax.f32 %v787, 0.0
    %v910 = vmax.f32 %v790, 0.0
    %v911 = vmax.f32 %v792, 0.0
    %v912 = vmax.f32 %v795, 0.0
    %v913 = vmax.f32 %v797, 0.0
    %v914 = vmax.f32 %v800, 0.0
    %v915 = vmax.f32 %v802, 0.0
    %v916 = vmax.f32 %v805, 0.0
    %v917 = vmax.f32 %v807, 0.0
    %v918 = vmax.f32 %v810, 0.0
    %v919 = vmax.f32 %v812, 0.0
    %v920 = vmax.f32 %v815, 0.0
    %v921 = vmax.f32 %v817, 0.0
    %v922 = vmax.f32 %v820, 0.0
    %v923 = vmax.f32 %v822, 0.0
    %v924 = vmax.f32 %v825, 0.0
    %v925 = vmax.f32 %v827, 0.0
    %v926 = vmax.f32 %v830, 0.0
    %v927 = vmax.f32 %v832, 0.0
    %v928 = vmax.f32 %v835, 0.0
    %v929 = vmax.f32 %v837, 0.0
    %v930 = vmax.f32 %v840, 0.0
    %v931 = vmax.f32 %v842, 0.0
    %v932 = vmax.f32 %v845, 0.0
    %v933 = vmax.f32 %v847, 0.0
    %v934 = vmax.f32 %v850, 0.0
    %v935 = vmax.f32 %v852, 0.0
    %v936 = vmax.f32 %v855, 0.0
    %v937 = vmax.f32 %v857, 0.0
    %v938 = vmax.f32 %v860, 0.0
    %v939 = vmax.f32 %v862, 0.0
    %v940 = vmax.f32 %v865, 0.0
    %v941 = vmax.f32 %v867, 0.0
    %v942 = vmax.f32 %v870, 0.0
    %v943 = vmax.f32 %v872, 0.0
    %v944 = vmax.f32 %v875, 0.0
    %v945 = vmax.f32 %v877, 0.0
    %v946 = vmax.f32 %v880, 0.0
    %v947 = vmax.f32 %v882, 0.0
    %v948 = vpack.c.bf16 %v884, %v884
    %v949 = vpack.c.bf16 %v885, %v885
    %v950 = vpack.c.bf16 %v886, %v886
    %v951 = vpack.c.bf16 %v887, %v887
    %v952 = vpack.c.bf16 %v888, %v888
    %v953 = vpack.c.bf16 %v889, %v889
    %v954 = vpack.c.bf16 %v890, %v890
    %v955 = vpack.c.bf16 %v891, %v891
    %v956 = vpack.c.bf16 %v892, %v892
    %v957 = vpack.c.bf16 %v893, %v893
    %v958 = vpack.c.bf16 %v894, %v894
    %v959 = vpack.c.bf16 %v895, %v895
    %v960 = vpack.c.bf16 %v896, %v896
    %v961 = vpack.c.bf16 %v897, %v897
    %v962 = vpack.c.bf16 %v898, %v898
    %v963 = vpack.c.bf16 %v899, %v899
    %v964 = vpack.c.bf16 %v900, %v900
    %v965 = vpack.c.bf16 %v901, %v901
    %v966 = vpack.c.bf16 %v902, %v902
    %v967 = vpack.c.bf16 %v903, %v903
    %v968 = vpack.c.bf16 %v904, %v904
    %v969 = vpack.c.bf16 %v905, %v905
    %v970 = vpack.c.bf16 %v906, %v906
    %v971 = vpack.c.bf16 %v907, %v907
    %v972 = vpack.c.bf16 %v908, %v908
    %v973 = vpack.c.bf16 %v909, %v909
    %v974 = vpack.c.bf16 %v910, %v910
    %v975 = vpack.c.bf16 %v911, %v911
    %v976 = vpack.c.bf16 %v912, %v912
    %v977 = vpack.c.bf16 %v913, %v913
    %v978 = vpack.c.bf16 %v914, %v914
    %v979 = vpack.c.bf16 %v915, %v915
    %v980 = vpack.c.bf16 %v916, %v916
    %v981 = vpack.c.bf16 %v917, %v917
    %v982 = vpack.c.bf16 %v918, %v918
    %v983 = vpack.c.bf16 %v919, %v919
    %v984 = vpack.c.bf16 %v920, %v920
    %v985 = vpack.c.bf16 %v921, %v921
    %v986 = vpack.c.bf16 %v922, %v922
    %v987 = vpack.c.bf16 %v923, %v923
    %v988 = vpack.c.bf16 %v924, %v924
    %v989 = vpack.c.bf16 %v925, %v925
    %v990 = vpack.c.bf16 %v926, %v926
    %v991 = vpack.c.bf16 %v927, %v927
    %v992 = vpack.c.bf16 %v928, %v928
    %v993 = vpack.c.bf16 %v929, %v929
    %v994 = vpack.c.bf16 %v930, %v930
    %v995 = vpack.c.bf16 %v931, %v931
    %v996 = vpack.c.bf16 %v932, %v932
    %v997 = vpack.c.bf16 %v933, %v933
    %v998 = vpack.c.bf16 %v934, %v934
    %v999 = vpack.c.bf16 %v935, %v935
    %v1000 = vpack.c.bf16 %v936, %v936
    %v1001 = vpack.c.bf16 %v937, %v937
    %v1002 = vpack.c.bf16 %v938, %v938
    %v1003 = vpack.c.bf16 %v939, %v939
    %v1004 = vpack.c.bf16 %v940, %v940
    %v1005 = vpack.c.bf16 %v941, %v941
    %v1006 = vpack.c.bf16 %v942, %v942
    %v1007 = vpack.c.bf16 %v943, %v943
    %v1008 = vpack.c.bf16 %v944, %v944
    %v1009 = vpack.c.bf16 %v945, %v945
    %v1010 = vpack.c.bf16 %v946, %v946
    %v1011 = vpack.c.bf16 %v947, %v947
    %vm1012 = vcmask 519168
    %1013 = vst.msk [vmem:[%s3] sm:$0xf] %vm1012, %v948
    %1014 = vst.msk [vmem:[%s3 + $0x4] sm:$0xf] %vm1012, %v949
    %1015 = vst.msk [vmem:[%s3 + $0x8] sm:$0xf] %vm1012, %v950
    %1016 = vst.msk [vmem:[%s3 + $0xc] sm:$0xf] %vm1012, %v951
    %1017 = vst.msk [vmem:[%s3 + $0x10] sm:$0xf] %vm1012, %v952
    %1018 = vst.msk [vmem:[%s3 + $0x14] sm:$0xf] %vm1012, %v953
    %1019 = vst.msk [vmem:[%s3 + $0x18] sm:$0xf] %vm1012, %v954
    %1020 = vst.msk [vmem:[%s3 + $0x1c] sm:$0xf] %vm1012, %v955
    %1021 = vst.msk [vmem:[%s3 + $0x20] sm:$0xf] %vm1012, %v956
    %1022 = vst.msk [vmem:[%s3 + $0x24] sm:$0xf] %vm1012, %v957
    %1023 = vst.msk [vmem:[%s3 + $0x28] sm:$0xf] %vm1012, %v958
    %1024 = vst.msk [vmem:[%s3 + $0x2c] sm:$0xf] %vm1012, %v959
    %1025 = vst.msk [vmem:[%s3 + $0x30] sm:$0xf] %vm1012, %v960
    %1026 = vst.msk [vmem:[%s3 + $0x34] sm:$0xf] %vm1012, %v961
    %1027 = vst.msk [vmem:[%s3 + $0x38] sm:$0xf] %vm1012, %v962
    %1028 = vst.msk [vmem:[%s3 + $0x3c] sm:$0xf] %vm1012, %v963
    %1029 = vst.msk [vmem:[%s3 + $0x40] sm:$0xf] %vm1012, %v964
    %1030 = vst.msk [vmem:[%s3 + $0x44] sm:$0xf] %vm1012, %v965
    %1031 = vst.msk [vmem:[%s3 + $0x48] sm:$0xf] %vm1012, %v966
    %1032 = vst.msk [vmem:[%s3 + $0x4c] sm:$0xf] %vm1012, %v967
    %1033 = vst.msk [vmem:[%s3 + $0x50] sm:$0xf] %vm1012, %v968
    %1034 = vst.msk [vmem:[%s3 + $0x54] sm:$0xf] %vm1012, %v969
    %1035 = vst.msk [vmem:[%s3 + $0x58] sm:$0xf] %vm1012, %v970
    %1036 = vst.msk [vmem:[%s3 + $0x5c] sm:$0xf] %vm1012, %v971
    %1037 = vst.msk [vmem:[%s3 + $0x60] sm:$0xf] %vm1012, %v972
    %1038 = vst.msk [vmem:[%s3 + $0x64] sm:$0xf] %vm1012, %v973
    %1039 = vst.msk [vmem:[%s3 + $0x68] sm:$0xf] %vm1012, %v974
    %1040 = vst.msk [vmem:[%s3 + $0x6c] sm:$0xf] %vm1012, %v975
    %1041 = vst.msk [vmem:[%s3 + $0x70] sm:$0xf] %vm1012, %v976
    %1042 = vst.msk [vmem:[%s3 + $0x74] sm:$0xf] %vm1012, %v977
    %1043 = vst.msk [vmem:[%s3 + $0x78] sm:$0xf] %vm1012, %v978
    %1044 = vst.msk [vmem:[%s3 + $0x7c] sm:$0xf] %vm1012, %v979
    %1045 = vst.msk [vmem:[%s3 + $0x80] sm:$0xf] %vm1012, %v980
    %1046 = vst.msk [vmem:[%s3 + $0x84] sm:$0xf] %vm1012, %v981
    %1047 = vst.msk [vmem:[%s3 + $0x88] sm:$0xf] %vm1012, %v982
    %1048 = vst.msk [vmem:[%s3 + $0x8c] sm:$0xf] %vm1012, %v983
    %1049 = vst.msk [vmem:[%s3 + $0x90] sm:$0xf] %vm1012, %v984
    %1050 = vst.msk [vmem:[%s3 + $0x94] sm:$0xf] %vm1012, %v985
    %1051 = vst.msk [vmem:[%s3 + $0x98] sm:$0xf] %vm1012, %v986
    %1052 = vst.msk [vmem:[%s3 + $0x9c] sm:$0xf] %vm1012, %v987
    %1053 = vst.msk [vmem:[%s3 + $0xa0] sm:$0xf] %vm1012, %v988
    %1054 = vst.msk [vmem:[%s3 + $0xa4] sm:$0xf] %vm1012, %v989
    %1055 = vst.msk [vmem:[%s3 + $0xa8] sm:$0xf] %vm1012, %v990
    %1056 = vst.msk [vmem:[%s3 + $0xac] sm:$0xf] %vm1012, %v991
    %1057 = vst.msk [vmem:[%s3 + $0xb0] sm:$0xf] %vm1012, %v992
    %1058 = vst.msk [vmem:[%s3 + $0xb4] sm:$0xf] %vm1012, %v993
    %1059 = vst.msk [vmem:[%s3 + $0xb8] sm:$0xf] %vm1012, %v994
    %1060 = vst.msk [vmem:[%s3 + $0xbc] sm:$0xf] %vm1012, %v995
    %1061 = vst.msk [vmem:[%s3 + $0xc0] sm:$0xf] %vm1012, %v996
    %1062 = vst.msk [vmem:[%s3 + $0xc4] sm:$0xf] %vm1012, %v997
    %1063 = vst.msk [vmem:[%s3 + $0xc8] sm:$0xf] %vm1012, %v998
    %1064 = vst.msk [vmem:[%s3 + $0xcc] sm:$0xf] %vm1012, %v999
    %1065 = vst.msk [vmem:[%s3 + $0xd0] sm:$0xf] %vm1012, %v1000
    %1066 = vst.msk [vmem:[%s3 + $0xd4] sm:$0xf] %vm1012, %v1001
    %1067 = vst.msk [vmem:[%s3 + $0xd8] sm:$0xf] %vm1012, %v1002
    %1068 = vst.msk [vmem:[%s3 + $0xdc] sm:$0xf] %vm1012, %v1003
    %1069 = vst.msk [vmem:[%s3 + $0xe0] sm:$0xf] %vm1012, %v1004
    %1070 = vst.msk [vmem:[%s3 + $0xe4] sm:$0xf] %vm1012, %v1005
    %1071 = vst.msk [vmem:[%s3 + $0xe8] sm:$0xf] %vm1012, %v1006
    %1072 = vst.msk [vmem:[%s3 + $0xec] sm:$0xf] %vm1012, %v1007
    %1073 = vst.msk [vmem:[%s3 + $0xf0] sm:$0xf] %vm1012, %v1008
    %1074 = vst.msk [vmem:[%s3 + $0xf4] sm:$0xf] %vm1012, %v1009
    %1075 = vst.msk [vmem:[%s3 + $0xf8] sm:$0xf] %vm1012, %v1010
    %1076 = vst.msk [vmem:[%s3 + $0xfc] sm:$0xf] %vm1012, %v1011
    // Predicated region
    $region18: #{matmul_affine.1} parent=1 // pred_check
      _
    $region19: #{matmul_affine.1} parent=1 // pred_check_branch
      %1078 = sbr.rel (0) target = $region21
    $region20: #{matmul_affine.1} parent=1 // pred_region
      _
    $region21: #{matmul_affine.1} parent=1 // pred_fallthru
      _
    // Predicated region
    $region22: #{matmul_affine.1} parent=1 // pred_check
      _
    $region23: #{matmul_affine.1} parent=1 // pred_check_branch
      %1080 = sbr.rel (0) target = $region25
    $region24: #{matmul_affine.1} parent=1 // pred_region
      _
    $region25: #{matmul_affine.1} parent=1 // pred_fallthru
      _
    %1081 = vsyncpa [#allocation3], 1

</llo_original>
